<compile_context>
chip_gen: v5e
topology: v5e:2x2
jax: 0.10.0
libtpu: 0.0.40
codegen_flags: <defaults>
</compile_context>

<pallas_src>
import math
import jax
import jax.numpy as jnp
from jax.experimental import pallas as pl
from jax.experimental.pallas import tpu as pltpu


def multi_head_attention(x, wk, wq, wv, wp, bp):
    """x: (B,T,C); wk/wq/wv: (H,C,hs) per-head (x @ W layout); wp: (H*hs,C); bp: (1,C)."""
    B, T, C = x.shape
    H, _, hs = wk.shape
    Hhs = H * hs
    scale = 1.0 / math.sqrt(hs)

    # --- host-side weight packing: one fused QKV weight, softmax scale folded into Wq ---
    def flatten_heads(w):                      # (H, C, hs) -> (C, H*hs); column h*hs+d == w[h, :, d]
        return jnp.transpose(w, (1, 0, 2)).reshape(C, Hhs)

    wqkv = jnp.concatenate(
        [flatten_heads(wq * scale), flatten_heads(wk), flatten_heads(wv)], axis=1
    )                                          # (C, 3*H*hs)

    def kernel(x_ref, wqkv_ref, wp_ref, bp_ref, out_ref):
        xb = x_ref[0]                                                        # (T, C)

        # Fused Q/K/V projection: one lane-dense matmul instead of 3*H tiny ones.
        qkv = jnp.dot(xb, wqkv_ref[...], preferred_element_type=jnp.float32)  # (T, 3*H*hs)

        def to_heads(mat):                                                   # (T, H*hs) -> (H, T, hs)
            return jnp.stack([mat[:, h * hs:(h + 1) * hs] for h in range(H)], axis=0)

        q = to_heads(qkv[:, 0 * Hhs:1 * Hhs])                                # already scaled
        k = to_heads(qkv[:, 1 * Hhs:2 * Hhs])
        v = to_heads(qkv[:, 2 * Hhs:3 * Hhs])

        # Shared additive causal mask (finite sentinel -> no -inf through the max/exp path).
        row = jax.lax.broadcasted_iota(jnp.int32, (T, T), 0)
        col = jax.lax.broadcasted_iota(jnp.int32, (T, T), 1)
        mask = jnp.where(row >= col, 0.0, -1e30).astype(jnp.float32)         # (T, T)

        # Head-batched attention (no per-head transposes or unrolled matmuls).
        s = jnp.einsum("htd,hkd->htk", q, k,
                       preferred_element_type=jnp.float32)                   # (H, T, T)
        s = s + mask                                                         # broadcast over heads
        s = s - jnp.max(s, axis=-1, keepdims=True)
        p = jnp.exp(s)
        denom = jnp.sum(p, axis=-1, keepdims=True)
        p = p * pl.reciprocal(denom, approx=True)                            # EUP, not a VPU divide

        o = jnp.einsum("htk,hkd->htd", p, v,
                       preferred_element_type=jnp.float32)                   # (H, T, hs)
        cat = jnp.concatenate([o[h] for h in range(H)], axis=-1)             # (T, H*hs)

        out = jnp.dot(cat, wp_ref[...],
                      preferred_element_type=jnp.float32) + bp_ref[...]      # (T, C)
        out_ref[0] = out.astype(out_ref.dtype)

    return pl.pallas_call(
        kernel,
        out_shape=jax.ShapeDtypeStruct((B, T, C), x.dtype),
        grid_spec=pltpu.PrefetchScalarGridSpec(
            num_scalar_prefetch=0,
            grid=(B,),                                       # 2-way "parallel" -> both v7x TCs busy
            in_specs=[
                pl.BlockSpec((1, T, C), lambda b: (b, 0, 0)),
                pl.BlockSpec((C, 3 * Hhs), lambda b: (0, 0)),   # constant index -> loaded once
                pl.BlockSpec((Hhs, C), lambda b: (0, 0)),
                pl.BlockSpec((1, C), lambda b: (0, 0)),
            ],
            out_specs=pl.BlockSpec((1, T, C), lambda b: (b, 0, 0)),
        ),
        compiler_params=pltpu.CompilerParams(dimension_semantics=("parallel",)),
    )(x, wqkv, wp, bp)


def reference(x, wk, wq, wv, wp, bp):
    """Pure-JAX reference matching the PyTorch forward (per-head, unfused)."""
    B, T, C = x.shape
    H, _, hs = wk.shape
    causal = jnp.tril(jnp.ones((T, T), dtype=bool))
    outs = []
    for h in range(H):
        k = x @ wk[h]
        q = x @ wq[h]
        v = x @ wv[h]
        scores = (q @ jnp.swapaxes(k, -2, -1)) / math.sqrt(hs)
        scores = jnp.where(causal, scores, -jnp.inf)
        w = jax.nn.softmax(scores, axis=-1)
        outs.append(w @ v)
    cat = jnp.concatenate(outs, axis=-1)
    return cat @ wp + bp[0]


if __name__ == "__main__":
    # module config: num_heads=4, head_size=8, n_embd=32, block_size=8
    B, T, C = 2, 8, 32
    H, hs = 4, 8

    key = jax.random.PRNGKey(0)
    kx, kk, kq, kv, kp, kb = jax.random.split(key, 6)

    x = jax.random.normal(kx, (B, T, C), dtype=jnp.float32)
    # nn.Linear(n_embd, head_size, bias=False): weight (hs, C) -> stored transposed (C, hs) per head.
    wk = jax.random.normal(kk, (H, C, hs), dtype=jnp.float32) * 0.1
    wq = jax.random.normal(kq, (H, C, hs), dtype=jnp.float32) * 0.1
    wv = jax.random.normal(kv, (H, C, hs), dtype=jnp.float32) * 0.1
    # nn.Linear(H*hs, n_embd): weight (C, H*hs) -> stored transposed (H*hs, C), bias (C,) as (1, C).
    wp = jax.random.normal(kp, (H * hs, C), dtype=jnp.float32) * 0.1
    bp = jax.random.normal(kb, (1, C), dtype=jnp.float32) * 0.1

    out = multi_head_attention(x, wk, wq, wv, wp, bp)
    jax.block_until_ready(out)

    ref = reference(x, wk, wq, wv, wp, bp)
    assert out.shape == (B, T, C)
    # 2e-3 tolerance accommodates the approximate (EUP) reciprocal used for softmax normalization.
    assert jnp.allclose(out, ref, atol=2e-3, rtol=2e-3), "mismatch vs reference"
    print("KERNEL_OK")
</pallas_src>

<mosaic_0001>
module attributes {stable_mosaic.version = 11 : i64} {
  func.func @kernel(%arg0: i32, %arg1: memref<1x8x32xf32, #tpu.memory_space<vmem>>, %arg2: memref<32x96xf32, #tpu.memory_space<vmem>>, %arg3: memref<32x32xf32, #tpu.memory_space<vmem>>, %arg4: memref<1x32xf32, #tpu.memory_space<vmem>>, %arg5: memref<1x8x32xf32, #tpu.memory_space<vmem>>) attributes {dimension_semantics = [#tpu.dimension_semantics<parallel>], iteration_bounds = array<i64: 2>, scalar_prefetch = 0 : i64, scratch_operands = 0 : i64, tpu.core_type = #tpu.core_type<tc>, window_params = [{transform_indices = @transform_0, window_bounds = array<i64: 1, 8, 32>}, {pipeline_mode = #tpu.pipeline_mode<synchronous>, transform_indices = @transform_1, window_bounds = array<i64: 32, 96>}, {pipeline_mode = #tpu.pipeline_mode<synchronous>, transform_indices = @transform_2, window_bounds = array<i64: 32, 32>}, {pipeline_mode = #tpu.pipeline_mode<synchronous>, transform_indices = @transform_3, window_bounds = array<i64: 1, 32>}, {transform_indices = @transform_4, window_bounds = array<i64: 1, 8, 32>}]} {
    %c0 = arith.constant 0 : index
    %c0_0 = arith.constant 0 : index
    %c0_1 = arith.constant 0 : index
    %0 = vector.load %arg1[%c0, %c0_0, %c0_1] : memref<1x8x32xf32, #tpu.memory_space<vmem>>, vector<1x8x32xf32>
    %1 = vector.shape_cast %0 : vector<1x8x32xf32> to vector<8x32xf32>
    %c0_2 = arith.constant 0 : index
    %c0_3 = arith.constant 0 : index
    %2 = vector.load %arg2[%c0_2, %c0_3] : memref<32x96xf32, #tpu.memory_space<vmem>>, vector<32x96xf32>
    %cst = arith.constant dense<0.000000e+00> : vector<8x96xf32>
    %3 = tpu.matmul %1, %2, %cst {dimension_numbers = #tpu.dot_dimension_numbers<[1], [0], [0], [1], [0, 0, 1, 1], [], []>} : vector<8x32xf32>, vector<32x96xf32>, vector<8x96xf32> -> vector<8x96xf32>
    %4 = vector.extract_strided_slice %3 {offsets = [0, 0], sizes = [8, 32], strides = [1, 1]} : vector<8x96xf32> to vector<8x32xf32>
    %5 = vector.extract_strided_slice %4 {offsets = [0, 0], sizes = [8, 8], strides = [1, 1]} : vector<8x32xf32> to vector<8x8xf32>
    %6 = vector.extract_strided_slice %4 {offsets = [0, 8], sizes = [8, 8], strides = [1, 1]} : vector<8x32xf32> to vector<8x8xf32>
    %7 = vector.extract_strided_slice %4 {offsets = [0, 16], sizes = [8, 8], strides = [1, 1]} : vector<8x32xf32> to vector<8x8xf32>
    %8 = vector.extract_strided_slice %4 {offsets = [0, 24], sizes = [8, 8], strides = [1, 1]} : vector<8x32xf32> to vector<8x8xf32>
    %9 = vector.shape_cast %5 : vector<8x8xf32> to vector<1x8x8xf32>
    %10 = vector.shape_cast %6 : vector<8x8xf32> to vector<1x8x8xf32>
    %11 = vector.shape_cast %7 : vector<8x8xf32> to vector<1x8x8xf32>
    %12 = vector.shape_cast %8 : vector<8x8xf32> to vector<1x8x8xf32>
    %13 = tpu.concatenate %9, %10, %11, %12 in 0 : vector<1x8x8xf32>, vector<1x8x8xf32>, vector<1x8x8xf32>, vector<1x8x8xf32> -> vector<4x8x8xf32>
    %14 = vector.extract_strided_slice %3 {offsets = [0, 32], sizes = [8, 32], strides = [1, 1]} : vector<8x96xf32> to vector<8x32xf32>
    %15 = vector.extract_strided_slice %14 {offsets = [0, 0], sizes = [8, 8], strides = [1, 1]} : vector<8x32xf32> to vector<8x8xf32>
    %16 = vector.extract_strided_slice %14 {offsets = [0, 8], sizes = [8, 8], strides = [1, 1]} : vector<8x32xf32> to vector<8x8xf32>
    %17 = vector.extract_strided_slice %14 {offsets = [0, 16], sizes = [8, 8], strides = [1, 1]} : vector<8x32xf32> to vector<8x8xf32>
    %18 = vector.extract_strided_slice %14 {offsets = [0, 24], sizes = [8, 8], strides = [1, 1]} : vector<8x32xf32> to vector<8x8xf32>
    %19 = vector.shape_cast %15 : vector<8x8xf32> to vector<1x8x8xf32>
    %20 = vector.shape_cast %16 : vector<8x8xf32> to vector<1x8x8xf32>
    %21 = vector.shape_cast %17 : vector<8x8xf32> to vector<1x8x8xf32>
    %22 = vector.shape_cast %18 : vector<8x8xf32> to vector<1x8x8xf32>
    %23 = tpu.concatenate %19, %20, %21, %22 in 0 : vector<1x8x8xf32>, vector<1x8x8xf32>, vector<1x8x8xf32>, vector<1x8x8xf32> -> vector<4x8x8xf32>
    %24 = vector.extract_strided_slice %3 {offsets = [0, 64], sizes = [8, 32], strides = [1, 1]} : vector<8x96xf32> to vector<8x32xf32>
    %25 = vector.extract_strided_slice %24 {offsets = [0, 0], sizes = [8, 8], strides = [1, 1]} : vector<8x32xf32> to vector<8x8xf32>
    %26 = vector.extract_strided_slice %24 {offsets = [0, 8], sizes = [8, 8], strides = [1, 1]} : vector<8x32xf32> to vector<8x8xf32>
    %27 = vector.extract_strided_slice %24 {offsets = [0, 16], sizes = [8, 8], strides = [1, 1]} : vector<8x32xf32> to vector<8x8xf32>
    %28 = vector.extract_strided_slice %24 {offsets = [0, 24], sizes = [8, 8], strides = [1, 1]} : vector<8x32xf32> to vector<8x8xf32>
    %29 = vector.shape_cast %25 : vector<8x8xf32> to vector<1x8x8xf32>
    %30 = vector.shape_cast %26 : vector<8x8xf32> to vector<1x8x8xf32>
    %31 = vector.shape_cast %27 : vector<8x8xf32> to vector<1x8x8xf32>
    %32 = vector.shape_cast %28 : vector<8x8xf32> to vector<1x8x8xf32>
    %33 = tpu.concatenate %29, %30, %31, %32 in 0 : vector<1x8x8xf32>, vector<1x8x8xf32>, vector<1x8x8xf32>, vector<1x8x8xf32> -> vector<4x8x8xf32>
    %34 = tpu.iota {dimensions = array<i32: 0>} : vector<8x8xi32>
    %35 = tpu.iota {dimensions = array<i32: 1>} : vector<8x8xi32>
    %36 = arith.cmpi sge, %34, %35 : vector<8x8xi32>
    %cst_4 = arith.constant 0.000000e+00 : f32
    %cst_5 = arith.constant -1.000000e+30 : f32
    %37 = vector.broadcast %cst_4 : f32 to vector<8x8xf32>
    %38 = vector.broadcast %cst_5 : f32 to vector<8x8xf32>
    %39 = arith.select %36, %37, %38 : vector<8x8xi1>, vector<8x8xf32>
    "tpu.trace_start"() <{level = 10 : i32, message = "htd,hkd->htk"}> : () -> ()
    %cst_6 = arith.constant dense<0.000000e+00> : vector<4x8x8xf32>
    %40 = tpu.matmul %13, %23, %cst_6 {dimension_numbers = #tpu.dot_dimension_numbers<[2], [2], [1], [1], [0, 0, 0, 1, 1, 1], [0], [0]>} : vector<4x8x8xf32>, vector<4x8x8xf32>, vector<4x8x8xf32> -> vector<4x8x8xf32>
    "tpu.trace_stop"() : () -> ()
    %41 = vector.shape_cast %39 : vector<8x8xf32> to vector<1x8x8xf32>
    %42 = vector.broadcast %41 : vector<1x8x8xf32> to vector<4x8x8xf32>
    %43 = arith.addf %40, %42 : vector<4x8x8xf32>
    %cst_7 = arith.constant dense<0xFF800000> : vector<4x8xf32>
    %44 = vector.multi_reduction <maximumf>, %43, %cst_7 [2] : vector<4x8x8xf32> to vector<4x8xf32>
    %45 = vector.shape_cast %44 : vector<4x8xf32> to vector<4x8x1xf32>
    %46 = vector.broadcast %45 : vector<4x8x1xf32> to vector<4x8x8xf32>
    %47 = arith.subf %43, %46 : vector<4x8x8xf32>
    %48 = math.exp %47 : vector<4x8x8xf32>
    %cst_8 = arith.constant dense<0.000000e+00> : vector<4x8xf32>
    %49 = vector.multi_reduction <add>, %48, %cst_8 [2] : vector<4x8x8xf32> to vector<4x8xf32>
    %50 = vector.shape_cast %49 : vector<4x8xf32> to vector<4x8x1xf32>
    %51 = tpu.reciprocal %50 {approx = true} : vector<4x8x1xf32> -> vector<4x8x1xf32>
    %52 = vector.broadcast %51 : vector<4x8x1xf32> to vector<4x8x8xf32>
    %53 = arith.mulf %48, %52 : vector<4x8x8xf32>
    "tpu.trace_start"() <{level = 10 : i32, message = "htk,hkd->htd"}> : () -> ()
    %cst_9 = arith.constant dense<0.000000e+00> : vector<4x8x8xf32>
    %54 = tpu.matmul %53, %33, %cst_9 {dimension_numbers = #tpu.dot_dimension_numbers<[2], [1], [1], [2], [0, 0, 0, 1, 1, 2], [0], [0]>} : vector<4x8x8xf32>, vector<4x8x8xf32>, vector<4x8x8xf32> -> vector<4x8x8xf32>
    "tpu.trace_stop"() : () -> ()
    %55 = vector.extract_strided_slice %54 {offsets = [0, 0, 0], sizes = [1, 8, 8], strides = [1, 1, 1]} : vector<4x8x8xf32> to vector<1x8x8xf32>
    %56 = vector.shape_cast %55 : vector<1x8x8xf32> to vector<8x8xf32>
    %57 = vector.extract_strided_slice %54 {offsets = [1, 0, 0], sizes = [1, 8, 8], strides = [1, 1, 1]} : vector<4x8x8xf32> to vector<1x8x8xf32>
    %58 = vector.shape_cast %57 : vector<1x8x8xf32> to vector<8x8xf32>
    %59 = vector.extract_strided_slice %54 {offsets = [2, 0, 0], sizes = [1, 8, 8], strides = [1, 1, 1]} : vector<4x8x8xf32> to vector<1x8x8xf32>
    %60 = vector.shape_cast %59 : vector<1x8x8xf32> to vector<8x8xf32>
    %61 = vector.extract_strided_slice %54 {offsets = [3, 0, 0], sizes = [1, 8, 8], strides = [1, 1, 1]} : vector<4x8x8xf32> to vector<1x8x8xf32>
    %62 = vector.shape_cast %61 : vector<1x8x8xf32> to vector<8x8xf32>
    %63 = tpu.concatenate %56, %58, %60, %62 in 1 : vector<8x8xf32>, vector<8x8xf32>, vector<8x8xf32>, vector<8x8xf32> -> vector<8x32xf32>
    %c0_10 = arith.constant 0 : index
    %c0_11 = arith.constant 0 : index
    %64 = vector.load %arg3[%c0_10, %c0_11] : memref<32x32xf32, #tpu.memory_space<vmem>>, vector<32x32xf32>
    %cst_12 = arith.constant dense<0.000000e+00> : vector<8x32xf32>
    %65 = tpu.matmul %63, %64, %cst_12 {dimension_numbers = #tpu.dot_dimension_numbers<[1], [0], [0], [1], [0, 0, 1, 1], [], []>} : vector<8x32xf32>, vector<32x32xf32>, vector<8x32xf32> -> vector<8x32xf32>
    %c0_13 = arith.constant 0 : index
    %c0_14 = arith.constant 0 : index
    %66 = vector.load %arg4[%c0_13, %c0_14] : memref<1x32xf32, #tpu.memory_space<vmem>>, vector<1x32xf32>
    %67 = vector.broadcast %66 : vector<1x32xf32> to vector<8x32xf32>
    %68 = arith.addf %65, %67 : vector<8x32xf32>
    %c0_15 = arith.constant 0 : index
    %c0_16 = arith.constant 0 : index
    %c0_17 = arith.constant 0 : index
    %69 = vector.load %arg5[%c0_15, %c0_16, %c0_17] : memref<1x8x32xf32, #tpu.memory_space<vmem>>, vector<1x8x32xf32>
    %70 = vector.shape_cast %69 : vector<1x8x32xf32> to vector<8x32xf32>
    %71 = vector.shape_cast %68 : vector<8x32xf32> to vector<1x8x32xf32>
    tpu.vector_store %arg5[%c0_15, %c0_16, %c0_17], %71 {strides = array<i32>} : memref<1x8x32xf32, #tpu.memory_space<vmem>>, vector<1x8x32xf32>,
    return
  }
  func.func @transform_0(%arg0: i32) -> (i32, i32, i32) {
    %c0_i32 = arith.constant 0 : i32
    %c0_i32_0 = arith.constant 0 : i32
    %c0_i32_1 = arith.constant 0 : i32
    return %arg0, %c0_i32, %c0_i32_0 : i32, i32, i32
  }
  func.func @transform_1(%arg0: i32) -> (i32, i32) {
    %c0_i32 = arith.constant 0 : i32
    %c0_i32_0 = arith.constant 0 : i32
    %c0_i32_1 = arith.constant 0 : i32
    return %c0_i32, %c0_i32_0 : i32, i32
  }
  func.func @transform_2(%arg0: i32) -> (i32, i32) {
    %c0_i32 = arith.constant 0 : i32
    %c0_i32_0 = arith.constant 0 : i32
    %c0_i32_1 = arith.constant 0 : i32
    return %c0_i32, %c0_i32_0 : i32, i32
  }
  func.func @transform_3(%arg0: i32) -> (i32, i32) {
    %c0_i32 = arith.constant 0 : i32
    %c0_i32_0 = arith.constant 0 : i32
    %c0_i32_1 = arith.constant 0 : i32
    return %c0_i32, %c0_i32_0 : i32, i32
  }
  func.func @transform_4(%arg0: i32) -> (i32, i32, i32) {
    %c0_i32 = arith.constant 0 : i32
    %c0_i32_0 = arith.constant 0 : i32
    %c0_i32_1 = arith.constant 0 : i32
    return %arg0, %c0_i32, %c0_i32_0 : i32, i32, i32
  }
}

</mosaic_0001>

<llo_original>
// kernel: tpu_custom_call.1
$region0: #{tpu_custom_call.1}
  #allocation0 [shape = 'u32[]', space=smem, size = 0x4, offset = 0x4, fixed_abs, tag = 'smem constant byte address 0x4 - core index']
  #allocation1 [shape = 'u32[72,128]{1,0:T(1,128)}', space=vmem, size = 0x9000, scoped, tag = 'internal scratch']
  %s0 = inlined_call_operand.hbm [shape: f32[2,8,32], index: 0, kind: input, shape index: {}]
  %s1 = inlined_call_operand.hbm [shape: f32[32,96], index: 1, kind: input, shape index: {}]
  %s2 = inlined_call_operand.hbm [shape: f32[32,32], index: 2, kind: input, shape index: {}]
  %s3 = inlined_call_operand.vmem [shape: f32[1,32], index: 3, kind: input, shape index: {}]
  %s4 = inlined_call_operand.hbm [shape: f32[2,8,32], index: 4, kind: output, shape index: {}]
  %s5 = sld [smem:[#allocation0]]
  $region61: #{tpu_custom_call.1} parent=0
    _
  %s7 = ssub.s32 1, %s5
  %s8 = scalar_select 0, %s7, %s5
  $region1: #{tpu_custom_call.1} parent=0
    #allocation2 [shape = 'u8[8192]{0}', space=vmem, size = 0x2000, scoped, tag = 'input window, operand 0']
    #allocation3 [shape = 's32[2]{0}', space=sflag, size = 0x8, scoped, tag = 'scoped memory for tpu_custom_call.1']
    #allocation4 [shape = 's32[2]{0}', space=sflag, size = 0x8, scoped, tag = 'scoped memory for tpu_custom_call.1']
    #allocation5 [shape = 'u8[16384]{0}', space=vmem, size = 0x4000, scoped, tag = 'input window, operand 1, single buffered']
    #allocation6 [shape = 's32[1]{0}', space=sflag, size = 0x4, scoped, tag = 'scoped memory for tpu_custom_call.1']
    #allocation7 [shape = 'u8[16384]{0}', space=vmem, size = 0x4000, scoped, tag = 'input window, operand 2, single buffered']
    #allocation8 [shape = 'u8[8192]{0}', space=vmem, size = 0x2000, scoped, tag = 'output window, operand 0']
    %9 = vsyncpa [#allocation3], 0
    %s10 = scalar_lea.sflag [#allocation3], 1
    %11 = vsyncpa %s10, 0
    %12 = vsyncpa [#allocation6], 0
    %13 = vsyncpa [#allocation4], 0
    %s14 = scalar_lea.sflag [#allocation4], 1
    %15 = vsyncpa %s14, 0
    loop: start=0, step=1, limit=4
    $region2: #{tpu_custom_call.1} parent=1 // loop_pre_header
      _
    $region3: #{tpu_custom_call.1} parent=1 // loop_header
      %s17 = sphi 0, %s21
      %p18 = scmp.ge.s32.totalorder %s17, 4
      %s27 = sphi 0, %s29
      %s30 = sphi 0, %s27
      %s31 = sphi 0, %s30
      %s47 = sphi 0, %s31
      %s51 = sphi 0, %s51
      %s53 = sphi 0, %s51
      %s54 = sphi 0, %s53
      %s68 = sphi 0, %s54
      %s72 = sphi 0, %s72
      %s74 = sphi 0, %s72
      %s75 = sphi 0, %s74
      %s89 = sphi 0, %s75
      %s93 = sphi 0, %s93
      %s95 = sphi 0, %s93
      %s96 = sphi 0, %s95
      %s110 = sphi 0, %s96
      %s116 = sphi 0, %s118
      %s119 = sphi 0, %s116
      %s120 = sphi 0, %s119
      %s136 = sphi 0, %s120
    $region4: #{tpu_custom_call.1} parent=1 // loop_header_branch
      %20 = sbr.rel (%p18) target = $region8
    $region5: #{tpu_custom_call.1} parent=1 // loop_body
      %s22 = ssub.s32 %s17, 1
      %s23 = ssub.s32 %s17, 2
      %s24 = sadd.s32 %s17, 1
      %s25 = ssub.s32 %s17, %s24
      %p26 = scmp.eq.s32.totalorder %s25, 0
      %s28 = sadd.s32 %s27, 1
      %s29 = scalar_select %p26, %s27, %s28
      %p32 = pneg %p26
      %p33 = scmp.eq.s32.totalorder %s17, 1
      %p34 = por %p32, %p33
      %p35 = scmp.ne.s32.totalorder %s27, %s30
      %p36 = scmp.eq.s32.totalorder %s17, 0
      %p37 = por %p35, %p36
      %p38 = scmp.ne.s32.totalorder %s27, %s30
      %p39 = scmp.eq.s32.totalorder %s22, 1
      %p40 = por %p38, %p39
      %p41 = scmp.ne.s32.totalorder %s30, %s31
      %p42 = scmp.eq.s32.totalorder %s22, 0
      %p43 = por %p41, %p42
      %p44 = scmp.ne.s32.totalorder %s30, %s31
      %p45 = scmp.eq.s32.totalorder %s23, 1
      %p46 = por %p44, %p45
      %p48 = scmp.ne.s32.totalorder %s31, %s47
      %p49 = scmp.eq.s32.totalorder %s23, 0
      %p50 = por %p48, %p49
      %s52 = sadd.s32 %s51, 1
      %p55 = scmp.eq.s32.totalorder %s17, 1
      %p56 = scmp.ne.s32.totalorder %s51, %s53
      %p57 = scmp.eq.s32.totalorder %s17, 0
      %p58 = por %p56, %p57
      %p59 = scmp.ne.s32.totalorder %s51, %s53
      %p60 = scmp.eq.s32.totalorder %s22, 1
      %p61 = por %p59, %p60
      %p62 = scmp.ne.s32.totalorder %s53, %s54
      %p63 = scmp.eq.s32.totalorder %s22, 0
      %p64 = por %p62, %p63
      %p65 = scmp.ne.s32.totalorder %s53, %s54
      %p66 = scmp.eq.s32.totalorder %s23, 1
      %p67 = por %p65, %p66
      %p69 = scmp.ne.s32.totalorder %s54, %s68
      %p70 = scmp.eq.s32.totalorder %s23, 0
      %p71 = por %p69, %p70
      %s73 = sadd.s32 %s72, 1
      %p76 = scmp.eq.s32.totalorder %s17, 1
      %p77 = scmp.ne.s32.totalorder %s72, %s74
      %p78 = scmp.eq.s32.totalorder %s17, 0
      %p79 = por %p77, %p78
      %p80 = scmp.ne.s32.totalorder %s72, %s74
      %p81 = scmp.eq.s32.totalorder %s22, 1
      %p82 = por %p80, %p81
      %p83 = scmp.ne.s32.totalorder %s74, %s75
      %p84 = scmp.eq.s32.totalorder %s22, 0
      %p85 = por %p83, %p84
      %p86 = scmp.ne.s32.totalorder %s74, %s75
      %p87 = scmp.eq.s32.totalorder %s23, 1
      %p88 = por %p86, %p87
      %p90 = scmp.ne.s32.totalorder %s75, %s89
      %p91 = scmp.eq.s32.totalorder %s23, 0
      %p92 = por %p90, %p91
      %s94 = sadd.s32 %s93, 1
      %p97 = scmp.eq.s32.totalorder %s17, 1
      %p98 = scmp.ne.s32.totalorder %s93, %s95
      %p99 = scmp.eq.s32.totalorder %s17, 0
      %p100 = por %p98, %p99
      %p101 = scmp.ne.s32.totalorder %s93, %s95
      %p102 = scmp.eq.s32.totalorder %s22, 1
      %p103 = por %p101, %p102
      %p104 = scmp.ne.s32.totalorder %s95, %s96
      %p105 = scmp.eq.s32.totalorder %s22, 0
      %p106 = por %p104, %p105
      %p107 = scmp.ne.s32.totalorder %s95, %s96
      %p108 = scmp.eq.s32.totalorder %s23, 1
      %p109 = por %p107, %p108
      %p111 = scmp.ne.s32.totalorder %s96, %s110
      %p112 = scmp.eq.s32.totalorder %s23, 0
      %p113 = por %p111, %p112
      %s114 = ssub.s32 %s17, %s24
      %p115 = scmp.eq.s32.totalorder %s114, 0
      %s117 = sadd.s32 %s116, 1
      %s118 = scalar_select %p115, %s116, %s117
      %p121 = pneg %p115
      %p122 = scmp.eq.s32.totalorder %s17, 1
      %p123 = por %p121, %p122
      %p124 = scmp.ne.s32.totalorder %s116, %s119
      %p125 = scmp.eq.s32.totalorder %s17, 0
      %p126 = por %p124, %p125
      %p127 = scmp.ne.s32.totalorder %s116, %s119
      %p128 = scmp.eq.s32.totalorder %s22, 1
      %p129 = por %p127, %p128
      %p130 = scmp.ne.s32.totalorder %s119, %s120
      %p131 = scmp.eq.s32.totalorder %s22, 0
      %p132 = por %p130, %p131
      %p133 = scmp.ne.s32.totalorder %s119, %s120
      %p134 = scmp.eq.s32.totalorder %s23, 1
      %p135 = por %p133, %p134
      %p137 = scmp.ne.s32.totalorder %s120, %s136
      %p138 = scmp.eq.s32.totalorder %s23, 0
      %p139 = por %p137, %p138
      %p140 = scmp.le.s32.totalorder 1, %s17
      %p141 = scmp.lt.s32.totalorder %s17, 3
      %p142 = pnand %p140, %p141
      %p143 = pneg %p142
      // Predicated region
      $region9: #{tpu_custom_call.1} parent=5 // pred_check
        _
      $region10: #{tpu_custom_call.1} parent=5 // pred_check_branch
        %145 = sbr.rel (%p142) target = $region12
      $region11: #{tpu_custom_call.1} parent=5 // pred_region
        %s146 = ssub.s32 %s17, 1
        // Predicated region
        $region13: #{tpu_custom_call.1} parent=11 // pred_check
          %p147 = pneg %p64
        $region14: #{tpu_custom_call.1} parent=11 // pred_check_branch
          %149 = sbr.rel (%p147) target = $region16
        $region15: #{tpu_custom_call.1} parent=11 // pred_region
          %151 = vsyncadd [#allocation6], 0
          %s152 = sshll.u32 %s1, 4
          %s153 = int_to_ptr.hbm [resolvable:$true] %s152
          %s154 = sshll.u32 [#allocation5], 4
          %s155 = int_to_ptr.vmem [resolvable:$true] %s154
          %160 = dma.hbm_to_vmem [thread:$0]  %s153, 512, %s155, [#allocation6], 128, 128, 8
        $region16: #{tpu_custom_call.1} parent=11 // pred_fallthru
          _
        // Predicated region
        $region17: #{tpu_custom_call.1} parent=11 // pred_check
          %p161 = pneg %p85
        $region18: #{tpu_custom_call.1} parent=11 // pred_check_branch
          %163 = sbr.rel (%p161) target = $region20
        $region19: #{tpu_custom_call.1} parent=11 // pred_region
          %165 = vsyncadd [#allocation6], 0
          %s166 = sshll.u32 %s2, 4
          %s167 = int_to_ptr.hbm [resolvable:$true] %s166
          %s168 = sshll.u32 [#allocation7], 4
          %s169 = int_to_ptr.vmem [resolvable:$true] %s168
          %174 = dma.hbm_to_vmem [thread:$0]  %s167, 512, %s169, [#allocation6], 128, 128, 8
        $region20: #{tpu_custom_call.1} parent=11 // pred_fallthru
          _
        // Predicated region
        $region21: #{tpu_custom_call.1} parent=11 // pred_check
          %p175 = pneg %p106
        $region22: #{tpu_custom_call.1} parent=11 // pred_check_branch
          %177 = sbr.rel (%p175) target = $region24
        $region23: #{tpu_custom_call.1} parent=11 // pred_region
          _
        $region24: #{tpu_custom_call.1} parent=11 // pred_fallthru
          _
      $region12: #{tpu_custom_call.1} parent=5 // pred_fallthru
        _
      %p178 = scmp.lt.s32.totalorder %s17, 2
      // Predicated region
      $region25: #{tpu_custom_call.1} parent=5 // pred_check
        %p179 = pneg %p178
      $region26: #{tpu_custom_call.1} parent=5 // pred_check_branch
        %181 = sbr.rel (%p179) target = $region28
      $region27: #{tpu_custom_call.1} parent=5 // pred_region
        // Predicated region
        $region29: #{tpu_custom_call.1} parent=27 // pred_check
          %p182 = pneg %p37
        $region30: #{tpu_custom_call.1} parent=27 // pred_check_branch
          %184 = sbr.rel (%p182) target = $region32
        $region31: #{tpu_custom_call.1} parent=27 // pred_region
          %s185 = sand.u32 %s27, 1
          %s186 = scalar_lea.sflag [#allocation3], %s185
          %s187 = sand.u32 %s27, 1
          %s188 = smul.addr %s187, 8
          %s189 = scalar_lea.vmem [#allocation2], %s188
          %191 = vsyncadd %s186, 0
          %s192 = smul.addr %s17, 8
          %s193 = scalar_lea.hbm %s0, %s192
          %s195 = sshll.u32 %s193, 4
          %s196 = int_to_ptr.hbm [resolvable:$true] %s195
          %s197 = sshll.u32 %s189, 4
          %s198 = int_to_ptr.vmem [resolvable:$true] %s197
          %200 = dma.hbm_to_vmem [thread:$0]  %s196, 128, %s198, %s186
        $region32: #{tpu_custom_call.1} parent=27 // pred_fallthru
          _
      $region28: #{tpu_custom_call.1} parent=5 // pred_fallthru
        _
      %p201 = scmp.le.s32.totalorder 1, %s17
      %p202 = scmp.lt.s32.totalorder %s17, 3
      %p203 = pnand %p201, %p202
      %p204 = pneg %p203
      // Predicated region
      $region33: #{tpu_custom_call.1} parent=5 // pred_check
        _
      $region34: #{tpu_custom_call.1} parent=5 // pred_check_branch
        %206 = sbr.rel (%p203) target = $region36
      $region35: #{tpu_custom_call.1} parent=5 // pred_region
        %s207 = ssub.s32 %s17, 1
        %s208 = sand.u32 %s30, 1
        %s209 = scalar_lea.sflag [#allocation3], %s208
        %s210 = sand.u32 %s30, 1
        %s211 = smul.addr %s210, 8
        %s212 = scalar_lea.vmem [#allocation2], %s211
        // Predicated region
        $region37: #{tpu_custom_call.1} parent=35 // pred_check
          %p213 = pneg %p43
        $region38: #{tpu_custom_call.1} parent=35 // pred_check_branch
          %215 = sbr.rel (%p213) target = $region40
        $region39: #{tpu_custom_call.1} parent=35 // pred_region
          %217 = dma.done %s209, 128
        $region40: #{tpu_custom_call.1} parent=35 // pred_fallthru
          _
        // Predicated region
        $region41: #{tpu_custom_call.1} parent=35 // pred_check
          %p218 = pneg %p64
        $region42: #{tpu_custom_call.1} parent=35 // pred_check_branch
          %220 = sbr.rel (%p218) target = $region44
        $region43: #{tpu_custom_call.1} parent=35 // pred_region
          %222 = dma.done [#allocation6], 512
        $region44: #{tpu_custom_call.1} parent=35 // pred_fallthru
          _
        // Predicated region
        $region45: #{tpu_custom_call.1} parent=35 // pred_check
          %p223 = pneg %p85
        $region46: #{tpu_custom_call.1} parent=35 // pred_check_branch
          %225 = sbr.rel (%p223) target = $region48
        $region47: #{tpu_custom_call.1} parent=35 // pred_region
          %227 = dma.done [#allocation6], 512
        $region48: #{tpu_custom_call.1} parent=35 // pred_fallthru
          _
        %s228 = sand.u32 %s30, 1
        %s229 = scalar_lea.sflag [#allocation3], %s228
        %s230 = sand.u32 %s30, 1
        %s231 = smul.addr %s230, 8
        %s232 = scalar_lea.vmem [#allocation2], %s231
        %p233 = pneg %p43
        %p234 = pneg %p40
        %p235 = pneg %p64
        %p236 = pneg %p61
        %p237 = pneg %p85
        %p238 = pneg %p82
        %p239 = pneg %p106
        %p240 = pneg %p103
        %p241 = pneg %p132
        %p242 = pneg %p129
        %s243 = sand.u32 %s119, 1
        %s244 = scalar_lea.sflag [#allocation4], %s243
        %s245 = sand.u32 %s119, 1
        %s246 = smul.addr %s245, 8
        %s247 = scalar_lea.vmem [#allocation8], %s246
        %v248 = vld [vmem:[%s212] sm:$0xff]
        %v249 = vld [vmem:[#allocation5] sm:$0xff]
        %v250 = vld [vmem:[#allocation5 + $0x8] sm:$0xff]
        %v251 = vld [vmem:[#allocation5 + $0x10] sm:$0xff]
        %v252 = vld [vmem:[#allocation5 + $0x18] sm:$0xff]
        %vm253 = vcmask 261120
        %v255 = vsel %vm253, %v248, 0
        %257 = vmatpush.msra.mxu0 0.0
        %258 = vmatpush.msra.mxu0 0.0
        %259 = vmatpush.msra.mxu0 0.0
        %260 = vmatpush.msra.mxu0 0.0
        %261 = vmatpush.msra.mxu0 0.0
        %262 = vmatpush.msra.mxu0 0.0
        %263 = vmatpush.msra.mxu0 0.0
        %264 = vmatpush.msra.mxu0 0.0
        %265 = vmatpush.msra.mxu0 0.0
        %266 = vmatpush.msra.mxu0 0.0
        %267 = vmatpush.msra.mxu0 0.0
        %268 = vmatpush.msra.mxu0 0.0
        %269 = vmatpush.msra.mxu0 %v252
        %270 = vmatpush.msra.mxu0 %v251
        %271 = vmatpush.msra.mxu0 %v250
        %272 = vmatpush.msra.mxu0 %v249
        %273 = vmatmul.f32.gmra.mxu0 %v255
        %v274 = vpop.f32.mrf.mxu0
        %v275 = vadd.f32 0.0, %v274
        %276 = vdwg.mxu0
        %278 = vrot.lane.b32.xlu0 %v275, 120
        %v279 = vpop.permute.xlu0 %278
        %280 = vrot.lane.b32.xlu0 %v275, 112
        %v281 = vpop.permute.xlu0 %280
        %282 = vrot.lane.b32.xlu0 %v275, 104
        %v283 = vpop.permute.xlu0 %282
        %v284 = vlaneseq
        %v285 = vshrl.u32 %v284, 7
        %v286 = vlaneseq
        %v287 = vand.u32 %v286, 127
        %vm288 = vcmp.ge.s32.totalorder %v285, %v287
        %v289 = vsel %vm288, 0.0, -1e+30
        %290 = vrot.lane.b32.xlu0 %v275, 96
        %v291 = vpop.permute.xlu0 %290
        %vm292 = vcmask 64512
        %v293 = vsel %vm292, %v275, 0
        %v295 = vsel %vm292, %v291, 0
        %297 = vmatpush.xpose.msra.mxu0 0.0
        %298 = vmatpush.xpose.msra.mxu0 0.0
        %299 = vmatpush.xpose.msra.mxu0 0.0
        %300 = vmatpush.xpose.msra.mxu0 0.0
        %301 = vmatpush.xpose.msra.mxu0 0.0
        %302 = vmatpush.xpose.msra.mxu0 0.0
        %303 = vmatpush.xpose.msra.mxu0 0.0
        %304 = vmatpush.xpose.msra.mxu0 0.0
        %305 = vmatpush.xpose.msra.mxu0 0.0
        %306 = vmatpush.xpose.msra.mxu0 0.0
        %307 = vmatpush.xpose.msra.mxu0 0.0
        %308 = vmatpush.xpose.msra.mxu0 0.0
        %309 = vmatpush.xpose.msra.mxu0 0.0
        %310 = vmatpush.xpose.msra.mxu0 0.0
        %311 = vmatpush.xpose.msra.mxu0 0.0
        %312 = vmatpush.xpose.msra.mxu0 %v295
        %313 = vmatmul.f32.gmra.mxu0 %v293
        %v314 = vpop.f32.mrf.mxu0
        %v315 = vadd.f32 %v289, %v314
        %316 = vdwg.mxu0
        %317 = vrot.lane.b32.xlu0 %v279, 96
        %v318 = vpop.permute.xlu0 %317
        %v319 = vsel %vm292, %v279, 0
        %v321 = vsel %vm292, %v318, 0
        %323 = vmatpush.xpose.msra.mxu0 0.0
        %324 = vmatpush.xpose.msra.mxu0 0.0
        %325 = vmatpush.xpose.msra.mxu0 0.0
        %326 = vmatpush.xpose.msra.mxu0 0.0
        %327 = vmatpush.xpose.msra.mxu0 0.0
        %328 = vmatpush.xpose.msra.mxu0 0.0
        %329 = vmatpush.xpose.msra.mxu0 0.0
        %330 = vmatpush.xpose.msra.mxu0 0.0
        %331 = vmatpush.xpose.msra.mxu0 0.0
        %332 = vmatpush.xpose.msra.mxu0 0.0
        %333 = vmatpush.xpose.msra.mxu0 0.0
        %334 = vmatpush.xpose.msra.mxu0 0.0
        %335 = vmatpush.xpose.msra.mxu0 0.0
        %336 = vmatpush.xpose.msra.mxu0 0.0
        %337 = vmatpush.xpose.msra.mxu0 0.0
        %338 = vmatpush.xpose.msra.mxu0 %v321
        %339 = vmatmul.f32.gmra.mxu0 %v319
        %v340 = vpop.f32.mrf.mxu0
        %v341 = vadd.f32 %v289, %v340
        %342 = vdwg.mxu0
        %343 = vrot.lane.b32.xlu0 %v281, 96
        %v344 = vpop.permute.xlu0 %343
        %v345 = vsel %vm292, %v281, 0
        %v347 = vsel %vm292, %v344, 0
        %349 = vmatpush.xpose.msra.mxu0 0.0
        %350 = vmatpush.xpose.msra.mxu0 0.0
        %351 = vmatpush.xpose.msra.mxu0 0.0
        %352 = vmatpush.xpose.msra.mxu0 0.0
        %353 = vmatpush.xpose.msra.mxu0 0.0
        %354 = vmatpush.xpose.msra.mxu0 0.0
        %355 = vmatpush.xpose.msra.mxu0 0.0
        %356 = vmatpush.xpose.msra.mxu0 0.0
        %357 = vmatpush.xpose.msra.mxu0 0.0
        %358 = vmatpush.xpose.msra.mxu0 0.0
        %359 = vmatpush.xpose.msra.mxu0 0.0
        %360 = vmatpush.xpose.msra.mxu0 0.0
        %361 = vmatpush.xpose.msra.mxu0 0.0
        %362 = vmatpush.xpose.msra.mxu0 0.0
        %363 = vmatpush.xpose.msra.mxu0 0.0
        %364 = vmatpush.xpose.msra.mxu0 %v347
        %365 = vmatmul.f32.gmra.mxu0 %v345
        %v366 = vpop.f32.mrf.mxu0
        %v367 = vadd.f32 %v289, %v366
        %368 = vdwg.mxu0
        %369 = vrot.lane.b32.xlu0 %v283, 96
        %v370 = vpop.permute.xlu0 %369
        %v371 = vsel %vm292, %v283, 0
        %v373 = vsel %vm292, %v370, 0
        %375 = vmatpush.xpose.msra.mxu0 0.0
        %376 = vmatpush.xpose.msra.mxu0 0.0
        %377 = vmatpush.xpose.msra.mxu0 0.0
        %378 = vmatpush.xpose.msra.mxu0 0.0
        %379 = vmatpush.xpose.msra.mxu0 0.0
        %380 = vmatpush.xpose.msra.mxu0 0.0
        %381 = vmatpush.xpose.msra.mxu0 0.0
        %382 = vmatpush.xpose.msra.mxu0 0.0
        %383 = vmatpush.xpose.msra.mxu0 0.0
        %384 = vmatpush.xpose.msra.mxu0 0.0
        %385 = vmatpush.xpose.msra.mxu0 0.0
        %386 = vmatpush.xpose.msra.mxu0 0.0
        %387 = vmatpush.xpose.msra.mxu0 0.0
        %388 = vmatpush.xpose.msra.mxu0 0.0
        %389 = vmatpush.xpose.msra.mxu0 0.0
        %390 = vmatpush.xpose.msra.mxu0 %v373
        %391 = vmatmul.f32.gmra.mxu0 %v371
        %v392 = vpop.f32.mrf.mxu0
        %v393 = vadd.f32 %v289, %v392
        %394 = vdwg.mxu0
        %v395 = vsel %vm292, %v315, -inf
        %396 = vmax.xlane.f32.xlu0 %v395
        %v397 = vpop.xlane.xlu0 %396
        %v398 = vsel %vm292, %v341, -inf
        %399 = vmax.xlane.f32.xlu0 %v398
        %v400 = vpop.xlane.xlu0 %399
        %v401 = vsel %vm292, %v367, -inf
        %402 = vmax.xlane.f32.xlu0 %v401
        %v403 = vpop.xlane.xlu0 %402
        %v404 = vsel %vm292, %v393, -inf
        %405 = vmax.xlane.f32.xlu0 %v404
        %v406 = vpop.xlane.xlu0 %405
        %v407 = vsub.f32 %v315, %v397
        %v408 = vsub.f32 %v341, %v400
        %v409 = vsub.f32 %v367, %v403
        %v410 = vsub.f32 %v393, %v406
        %v411 = vmul.f32 %v407, 1.442695
        %v412 = vpow.pop %v411
        %v413 = vmul.f32 %v408, 1.442695
        %v414 = vpow.pop %v413
        %v415 = vmul.f32 %v409, 1.442695
        %v416 = vpow.pop %v415
        %v417 = vmul.f32 %v410, 1.442695
        %v418 = vpow.pop %v417
        %v419 = vsel %vm292, %v412, 0.0
        %420 = vadd.xlane.f32.xlu0 %v419
        %v421 = vpop.xlane.xlu0 %420
        %v422 = vsel %vm292, %v414, 0.0
        %423 = vadd.xlane.f32.xlu0 %v422
        %v424 = vpop.xlane.xlu0 %423
        %v425 = vsel %vm292, %v416, 0.0
        %426 = vadd.xlane.f32.xlu0 %v425
        %v427 = vpop.xlane.xlu0 %426
        %v428 = vsel %vm292, %v418, 0.0
        %429 = vadd.xlane.f32.xlu0 %v428
        %v430 = vpop.xlane.xlu0 %429
        %v431 = vrcp.pop %v421
        %v432 = vrcp.pop %v424
        %v433 = vrcp.pop %v427
        %v434 = vrcp.pop %v430
        %v435 = vmul.f32 %v412, %v431
        %v436 = vmul.f32 %v414, %v432
        %v437 = vmul.f32 %v416, %v433
        %v438 = vmul.f32 %v418, %v434
        %439 = vrot.lane.b32.xlu0 %v275, 64
        %v440 = vpop.permute.xlu0 %439
        %v443 = vsel %vm292, %v435, 0
        %445 = vmatpush.msra.mxu0 0.0
        %446 = vmatpush.msra.mxu0 0.0
        %447 = vmatpush.msra.mxu0 0.0
        %448 = vmatpush.msra.mxu0 0.0
        %449 = vmatpush.msra.mxu0 0.0
        %450 = vmatpush.msra.mxu0 0.0
        %451 = vmatpush.msra.mxu0 0.0
        %452 = vmatpush.msra.mxu0 0.0
        %453 = vmatpush.msra.mxu0 0.0
        %454 = vmatpush.msra.mxu0 0.0
        %455 = vmatpush.msra.mxu0 0.0
        %456 = vmatpush.msra.mxu0 0.0
        %457 = vmatpush.msra.mxu0 0.0
        %458 = vmatpush.msra.mxu0 0.0
        %459 = vmatpush.msra.mxu0 0.0
        %460 = vmatpush.msra.mxu0 %v440
        %461 = vmatmul.f32.gmra.mxu0 %v443
        %v462 = vpop.f32.mrf.mxu0
        %v463 = vadd.f32 0.0, %v462
        %464 = vdwg.mxu0
        %465 = vrot.lane.b32.xlu0 %v279, 64
        %v466 = vpop.permute.xlu0 %465
        %v469 = vsel %vm292, %v436, 0
        %471 = vmatpush.msra.mxu0 0.0
        %472 = vmatpush.msra.mxu0 0.0
        %473 = vmatpush.msra.mxu0 0.0
        %474 = vmatpush.msra.mxu0 0.0
        %475 = vmatpush.msra.mxu0 0.0
        %476 = vmatpush.msra.mxu0 0.0
        %477 = vmatpush.msra.mxu0 0.0
        %478 = vmatpush.msra.mxu0 0.0
        %479 = vmatpush.msra.mxu0 0.0
        %480 = vmatpush.msra.mxu0 0.0
        %481 = vmatpush.msra.mxu0 0.0
        %482 = vmatpush.msra.mxu0 0.0
        %483 = vmatpush.msra.mxu0 0.0
        %484 = vmatpush.msra.mxu0 0.0
        %485 = vmatpush.msra.mxu0 0.0
        %486 = vmatpush.msra.mxu0 %v466
        %487 = vmatmul.f32.gmra.mxu0 %v469
        %v488 = vpop.f32.mrf.mxu0
        %v489 = vadd.f32 0.0, %v488
        %490 = vdwg.mxu0
        %491 = vrot.lane.b32.xlu0 %v281, 64
        %v492 = vpop.permute.xlu0 %491
        %v495 = vsel %vm292, %v437, 0
        %497 = vmatpush.msra.mxu0 0.0
        %498 = vmatpush.msra.mxu0 0.0
        %499 = vmatpush.msra.mxu0 0.0
        %500 = vmatpush.msra.mxu0 0.0
        %501 = vmatpush.msra.mxu0 0.0
        %502 = vmatpush.msra.mxu0 0.0
        %503 = vmatpush.msra.mxu0 0.0
        %504 = vmatpush.msra.mxu0 0.0
        %505 = vmatpush.msra.mxu0 0.0
        %506 = vmatpush.msra.mxu0 0.0
        %507 = vmatpush.msra.mxu0 0.0
        %508 = vmatpush.msra.mxu0 0.0
        %509 = vmatpush.msra.mxu0 0.0
        %510 = vmatpush.msra.mxu0 0.0
        %511 = vmatpush.msra.mxu0 0.0
        %512 = vmatpush.msra.mxu0 %v492
        %513 = vmatmul.f32.gmra.mxu0 %v495
        %v514 = vpop.f32.mrf.mxu0
        %v515 = vadd.f32 0.0, %v514
        %516 = vdwg.mxu0
        %517 = vrot.lane.b32.xlu0 %v283, 64
        %v518 = vpop.permute.xlu0 %517
        %v521 = vsel %vm292, %v438, 0
        %523 = vmatpush.msra.mxu0 0.0
        %524 = vmatpush.msra.mxu0 0.0
        %525 = vmatpush.msra.mxu0 0.0
        %526 = vmatpush.msra.mxu0 0.0
        %527 = vmatpush.msra.mxu0 0.0
        %528 = vmatpush.msra.mxu0 0.0
        %529 = vmatpush.msra.mxu0 0.0
        %530 = vmatpush.msra.mxu0 0.0
        %531 = vmatpush.msra.mxu0 0.0
        %532 = vmatpush.msra.mxu0 0.0
        %533 = vmatpush.msra.mxu0 0.0
        %534 = vmatpush.msra.mxu0 0.0
        %535 = vmatpush.msra.mxu0 0.0
        %536 = vmatpush.msra.mxu0 0.0
        %537 = vmatpush.msra.mxu0 0.0
        %538 = vmatpush.msra.mxu0 %v518
        %539 = vmatmul.f32.gmra.mxu0 %v521
        %v540 = vpop.f32.mrf.mxu0
        %v541 = vadd.f32 0.0, %v540
        %542 = vdwg.mxu0
        %544 = vrot.lane.b32.xlu0 %v489, 8
        %v545 = vpop.permute.xlu0 %544
        %548 = vrot.lane.b32.xlu0 %v515, 16
        %v549 = vpop.permute.xlu0 %548
        %552 = vrot.lane.b32.xlu0 %v541, 24
        %v553 = vpop.permute.xlu0 %552
        %v555 = vsel %vm292, %v463, %v545
        %vm556 = vcmask 130048
        %v557 = vsel %vm556, %v555, %v549
        %vm558 = vcmask 195584
        %v559 = vsel %vm558, %v557, %v553
        %v560 = vld [vmem:[#allocation7] sm:$0xff]
        %v561 = vld [vmem:[#allocation7 + $0x8] sm:$0xff]
        %v562 = vld [vmem:[#allocation7 + $0x10] sm:$0xff]
        %v563 = vld [vmem:[#allocation7 + $0x18] sm:$0xff]
        %v564 = vld [vmem:[%s3] sm:$0x1]
        %v566 = vperm.slane %v564, 0
        %v569 = vsel %vm253, %v559, 0
        %571 = vmatpush.msra.mxu0 0.0
        %572 = vmatpush.msra.mxu0 0.0
        %573 = vmatpush.msra.mxu0 0.0
        %574 = vmatpush.msra.mxu0 0.0
        %575 = vmatpush.msra.mxu0 0.0
        %576 = vmatpush.msra.mxu0 0.0
        %577 = vmatpush.msra.mxu0 0.0
        %578 = vmatpush.msra.mxu0 0.0
        %579 = vmatpush.msra.mxu0 0.0
        %580 = vmatpush.msra.mxu0 0.0
        %581 = vmatpush.msra.mxu0 0.0
        %582 = vmatpush.msra.mxu0 0.0
        %583 = vmatpush.msra.mxu0 %v563
        %584 = vmatpush.msra.mxu0 %v562
        %585 = vmatpush.msra.mxu0 %v561
        %586 = vmatpush.msra.mxu0 %v560
        %587 = vmatmul.f32.gmra.mxu0 %v569
        %v588 = vpop.f32.mrf.mxu0
        %v589 = vadd.f32 %v566, %v588
        %590 = vdwg.mxu0
        %591 = vst.msk [vmem:[%s247] sm:$0xff] %vm253, %v589
        %s592 = sand.u32 %s119, 1
        %s593 = scalar_lea.sflag [#allocation4], %s592
        %s594 = sand.u32 %s119, 1
        %s595 = smul.addr %s594, 8
        %s596 = scalar_lea.vmem [#allocation8], %s595
        // Predicated region
        $region49: #{tpu_custom_call.1} parent=35 // pred_check
          %p597 = pneg %p129
        $region50: #{tpu_custom_call.1} parent=35 // pred_check_branch
          %599 = sbr.rel (%p597) target = $region52
        $region51: #{tpu_custom_call.1} parent=35 // pred_region
          %601 = vsyncadd %s593, 0
          %s602 = smul.addr %s22, 8
          %s603 = scalar_lea.hbm %s4, %s602
          %s605 = sshll.u32 %s596, 4
          %s606 = int_to_ptr.vmem [resolvable:$true] %s605
          %s607 = sshll.u32 %s603, 4
          %s608 = int_to_ptr.hbm [resolvable:$true] %s607
          %610 = dma.vmem_to_hbm [thread:$0]  %s606, 128, %s608, %s593
        $region52: #{tpu_custom_call.1} parent=35 // pred_fallthru
          _
      $region36: #{tpu_custom_call.1} parent=5 // pred_fallthru
        _
      %p611 = scmp.le.s32.totalorder 2, %s17
      // Predicated region
      $region53: #{tpu_custom_call.1} parent=5 // pred_check
        %p612 = pneg %p611
      $region54: #{tpu_custom_call.1} parent=5 // pred_check_branch
        %614 = sbr.rel (%p612) target = $region56
      $region55: #{tpu_custom_call.1} parent=5 // pred_region
        %s615 = ssub.s32 %s17, 2
        // Predicated region
        $region57: #{tpu_custom_call.1} parent=55 // pred_check
          %p616 = pneg %p135
        $region58: #{tpu_custom_call.1} parent=55 // pred_check_branch
          %618 = sbr.rel (%p616) target = $region60
        $region59: #{tpu_custom_call.1} parent=55 // pred_region
          %s619 = sand.u32 %s120, 1
          %s620 = scalar_lea.sflag [#allocation4], %s619
          %s621 = sand.u32 %s120, 1
          %s622 = smul.addr %s621, 8
          %s623 = scalar_lea.vmem [#allocation8], %s622
          %625 = dma.done %s620, 128
        $region60: #{tpu_custom_call.1} parent=55 // pred_fallthru
          _
      $region56: #{tpu_custom_call.1} parent=5 // pred_fallthru
        _
    $region6: #{tpu_custom_call.1} parent=1 // loop_footer
      %s21 = sadd.s32 1, %s17
    $region7: #{tpu_custom_call.1} parent=1 // loop_footer_branch
      %16 = sbr.rel target = $region3
    $region8: #{tpu_custom_call.1} parent=1 // loop_exit
      _
    %626 = vsyncpa [#allocation3], 1
    %s627 = scalar_lea.sflag [#allocation3], 1
    %628 = vsyncpa %s627, 1
    %629 = vsyncpa [#allocation6], 1
    %630 = vsyncpa [#allocation4], 1
    %s631 = scalar_lea.sflag [#allocation4], 1
    %632 = vsyncpa %s631, 1

</llo_original>
